<compile_context>
chip_gen: v7x
topology: tpu7x:2x2x1
jax: 0.10.0
libtpu: 0.0.40
codegen_flags: <defaults>
</compile_context>

<pallas_src>
import functools

import jax
import jax.numpy as jnp
from jax import lax
from jax.experimental import pallas as pl
from jax.experimental.pallas import tpu as pltpu

_EPS = 1e-12            # F.normalize default eps
_EPS2 = _EPS * _EPS     # max(sqrt(s), eps) == sqrt(max(s, eps^2))


def _selector_kernel(has_prev, *refs):
    if has_prev:
        (q_ref, ops_ref, wq_ref, bq_ref, wo_op_ref, bo_ref,
         prev_ref, wo_prev_ref, out_ref) = refs
    else:
        (q_ref, ops_ref, wq_ref, bq_ref, wo_op_ref, bo_ref, out_ref) = refs

    f32 = jnp.float32

    # ---- query projection: (1, D) @ (D, H) + (1, H) ----
    q_proj = jnp.dot(q_ref[...], wq_ref[...],
                     preferred_element_type=f32) + bq_ref[...]          # (1, H)

    # ---- operator projection: bias + rank-1 prev folded into one row ----
    bias_row = bo_ref[...]                                              # (1, H)
    if has_prev:
        prev_row = prev_ref[0:1, :]          # first previously-selected operator
        bias_row = bias_row + jnp.dot(prev_row, wo_prev_ref[...],
                                      preferred_element_type=f32)       # (1, H)
    op_proj = jnp.dot(ops_ref[...], wo_op_ref[...],
                      preferred_element_type=f32) + bias_row            # (N, H)

    # ---- normalize operator rows (VPU/XLU, off the MXU path) ----
    op_sumsq = jnp.sum(op_proj * op_proj, axis=-1, keepdims=True)       # (N, 1)
    op_n = op_proj * lax.rsqrt(jnp.maximum(op_sumsq, _EPS2))            # (N, H)

    # query normalization deferred to the score level (cosine similarity)
    q_sumsq = jnp.sum(q_proj * q_proj, axis=-1, keepdims=True)          # (1, 1)
    inv_qn = lax.rsqrt(jnp.maximum(q_sumsq, _EPS2))                     # (1, 1)

    # ---- single score matmul, contracting over H (no explicit .T) ----
    contract = (((1,), (1,)), ((), ()))
    raw = lax.dot_general(q_proj, op_n, contract,
                          preferred_element_type=f32)                   # (1, N)
    scores = raw * inv_qn                                               # (1, N)

    # ---- softmax / log_softmax over the operator (lane) axis ----
    m = jnp.max(scores, axis=-1, keepdims=True)
    shifted = scores - m
    e = jnp.exp(shifted)
    denom = jnp.sum(e, axis=-1, keepdims=True)
    probs = e * pl.reciprocal(denom)
    logp = shifted - jnp.log(denom)

    # merged (2, N) output: row 0 = log_probs, row 1 = probs  (single store)
    out_ref[...] = jnp.concatenate([logp, probs], axis=0)


def _run_selector(q3, ops2, wq, bq, wo_op, bo, prev=None, wo_prev=None):
    """Batched selector.

    q3   : (B, 1, D)   per-call query rows
    ops2 : (N, D)      operator table, shared across all grid steps
    prev : None, (P, D) shared previous-operator table (row 0 is used), or
           (B, 1, D) per-call previous-operator rows
    Weights stored transposed as (in_features, hidden); biases (1, hidden).
    Returns (B, 2, N) f32: [:,0,:] = log_probs, [:,1,:] = probs.
    """
    B, _, D = q3.shape
    N = ops2.shape[0]
    H = wq.shape[1]
    has_prev = prev is not None

    def per_call(tail_shape):
        # One (1, ...) slab of a (B, ...) array per grid step.
        return pl.BlockSpec((None,) + tuple(tail_shape),
                            lambda b: (b,) + (0,) * len(tail_shape))

    def resident(shape):
        # Constant index_map -> DMA'd into VMEM once, reused every step.
        nd = len(shape)
        return pl.BlockSpec(tuple(shape), lambda b: (0,) * nd)

    in_specs = [per_call((1, D)),        # query
                resident(ops2.shape),    # operators (shared)
                resident(wq.shape), resident(bq.shape),
                resident(wo_op.shape), resident(bo.shape)]
    args = [q3, ops2, wq, bq, wo_op, bo]

    if has_prev:
        if prev.ndim == 2:               # shared (P, D): kernel reads row 0
            in_specs.append(resident(prev.shape))
        else:                            # per-call (B, 1, D)
            in_specs.append(per_call(prev.shape[1:]))
        in_specs.append(resident(wo_prev.shape))
        args += [prev, wo_prev]

    out_shape = jax.ShapeDtypeStruct((B, 2, N), jnp.float32)
    out_spec = per_call((2, N))

    flops = 2 * B * H * (D * (N + 1 + (1 if has_prev else 0)) + N)
    transcendentals = B * (2 * N + 4)              # exp, rsqrt, log, reciprocal
    bytes_accessed = (sum(int(a.size) * a.dtype.itemsize for a in args)
                      + B * 2 * N * 4)

    return pl.pallas_call(
        functools.partial(_selector_kernel, has_prev),
        grid=(B,),
        in_specs=in_specs,
        out_specs=out_spec,
        out_shape=out_shape,
        compiler_params=pltpu.CompilerParams(
            dimension_semantics=("parallel",)),
        cost_estimate=pl.CostEstimate(flops=flops,
                                      transcendentals=transcendentals,
                                      bytes_accessed=bytes_accessed),
    )(*args)


def init_operator_selector_params(key, input_dim=384, hidden_dim=32,
                                  is_first_layer=False,
                                  compute_dtype=jnp.bfloat16):
    """Init mimicking torch.nn.Linear (uniform +-1/sqrt(fan_in)).

    Weights are stored transposed (in, hidden), pre-split into wo_op/wo_prev,
    and cast to `compute_dtype` (bf16) for the MXU; biases stay f32.
    """
    op_in = input_dim if is_first_layer else input_dim * 2
    kq_w, kq_b, ko_w, ko_b = jax.random.split(key, 4)

    def lin(kw, kb, fan_in, fan_out):
        bound = 1.0 / jnp.sqrt(jnp.float32(fan_in))
        w = jax.random.uniform(kw, (fan_in, fan_out), jnp.float32, -bound, bound)
        b = jax.random.uniform(kb, (1, fan_out), jnp.float32, -bound, bound)
        return w, b

    wq, bq = lin(kq_w, kq_b, input_dim, hidden_dim)
    wo_full, bo = lin(ko_w, ko_b, op_in, hidden_dim)
    if is_first_layer:
        wo_op, wo_prev = wo_full, None
    else:
        wo_op, wo_prev = wo_full[:input_dim, :], wo_full[input_dim:, :]

    return {
        "wq": wq.astype(compute_dtype), "bq": bq,
        "wo_op": wo_op.astype(compute_dtype),
        "wo_prev": None if wo_prev is None else wo_prev.astype(compute_dtype),
        "bo": bo,
        "is_first_layer": is_first_layer,
    }


def operator_selector_forward(params, query_embed, operators_embed,
                              prev_operators_embed=None):
    """JAX/Pallas equivalent of OperatorSelector.forward -> (log_probs, probs).

    Shapes match the torch module: query (D,) or (B, D); operators (N, D);
    prev (P, D) (row 0 is used).  Returns ((B, N), (B, N)) with B>=1.
    """
    if query_embed.ndim == 1:
        query_embed = query_embed[None, :]
    cdt = params["wq"].dtype
    q3 = query_embed.astype(cdt)[:, None, :]                     # (B, 1, D)
    ops = operators_embed.astype(cdt)                             # (N, D)

    use_prev = (prev_operators_embed is not None) and (not params["is_first_layer"])
    if use_prev:
        prev = prev_operators_embed.astype(cdt)                   # (P, D) shared
        out = _run_selector(q3, ops, params["wq"], params["bq"],
                            params["wo_op"], params["bo"],
                            prev, params["wo_prev"])
    else:
        out = _run_selector(q3, ops, params["wq"], params["bq"],
                            params["wo_op"], params["bo"])
    return out[:, 0, :], out[:, 1, :]


def operator_selector_forward_batched(params, query_embeds, operators_embed,
                                      prev_rows=None):
    """Batch B selector calls through ONE pallas_call (weights resident).

    query_embeds: (B, D); operators_embed: (N, D) shared;
    prev_rows: (B, D) per-call previously-selected operator rows (or None).
    """
    cdt = params["wq"].dtype
    q3 = query_embeds.astype(cdt)[:, None, :]                     # (B, 1, D)
    ops = operators_embed.astype(cdt)

    use_prev = (prev_rows is not None) and (not params["is_first_layer"])
    if use_prev:
        prev3 = prev_rows.astype(cdt)[:, None, :]                 # (B, 1, D)
        out = _run_selector(q3, ops, params["wq"], params["bq"],
                            params["wo_op"], params["bo"],
                            prev3, params["wo_prev"])
    else:
        out = _run_selector(q3, ops, params["wq"], params["bq"],
                            params["wo_op"], params["bo"])
    return out[:, 0, :], out[:, 1, :]


if __name__ == "__main__":
    input_dim = 32
    hidden_dim = 32
    num_operators = 8
    batch = 4

    key = jax.random.PRNGKey(0)
    k_params, k_q, k_ops, k_prev, k_qb, k_pb = jax.random.split(key, 6)

    params = init_operator_selector_params(
        k_params, input_dim=input_dim, hidden_dim=hidden_dim,
        is_first_layer=False)

    query_embed = jax.random.normal(k_q, (input_dim,), jnp.float32)
    operators_embed = jax.random.normal(k_ops, (num_operators, input_dim),
                                        jnp.float32)
    prev_operators_embed = jax.random.normal(k_prev, (3, input_dim), jnp.float32)

    # ---- plain-JAX reference (original math), on the same bf16-quantized
    # operands the kernel sees, so the comparison isolates kernel correctness.
    def ref(params, q2d, ops, prev_row):
        cdt = params["wq"].dtype
        up = lambda x: x.astype(cdt).astype(jnp.float32)
        qp = up(q2d) @ up(params["wq"]) + params["bq"]
        qn = qp / jnp.maximum(jnp.linalg.norm(qp, axis=1, keepdims=True), _EPS)
        op = up(ops) @ up(params["wo_op"]) + params["bo"]
        if (prev_row is not None) and (not params["is_first_layer"]):
            op = op + up(prev_row)[None, :] @ up(params["wo_prev"])
        opn = op / jnp.maximum(jnp.linalg.norm(op, axis=1, keepdims=True), _EPS)
        s = qn @ opn.T
        return jax.nn.log_softmax(s, axis=1), jax.nn.softmax(s, axis=1)

    # ---- single-call path (matches the torch module signature) ----
    log_probs, probs = operator_selector_forward(
        params, query_embed, operators_embed, prev_operators_embed)
    jax.block_until_ready((log_probs, probs))

    lp_ref, p_ref = ref(params, query_embed[None, :], operators_embed,
                        prev_operators_embed[0])
    assert jnp.allclose(log_probs, lp_ref, atol=2e-3), "log_probs mismatch"
    assert jnp.allclose(probs, p_ref, atol=2e-3), "probs mismatch"
    assert jnp.allclose(jnp.sum(probs), 1.0, atol=1e-4)

    # ---- batched path: B selector calls in one pallas_call ----
    queries_b = jax.random.normal(k_qb, (batch, input_dim), jnp.float32)
    prev_rows_b = jax.random.normal(k_pb, (batch, input_dim), jnp.float32)
    lp_b, p_b = operator_selector_forward_batched(
        params, queries_b, operators_embed, prev_rows_b)
    jax.block_until_ready((lp_b, p_b))
    for b in range(batch):
        lp_r, p_r = ref(params, queries_b[b][None, :], operators_embed,
                        prev_rows_b[b])
        assert jnp.allclose(lp_b[b:b + 1], lp_r, atol=2e-3), "batched log_probs mismatch"
        assert jnp.allclose(p_b[b:b + 1], p_r, atol=2e-3), "batched probs mismatch"
    assert jnp.allclose(jnp.sum(p_b, axis=-1), jnp.ones((batch,)), atol=1e-4)

    # ---- first-layer (no prev) path ----
    params_fl = init_operator_selector_params(
        k_params, input_dim=input_dim, hidden_dim=hidden_dim,
        is_first_layer=True)
    lp_fl, p_fl = operator_selector_forward(params_fl, query_embed,
                                            operators_embed, None)
    jax.block_until_ready((lp_fl, p_fl))
    lp_fr, p_fr = ref(params_fl, query_embed[None, :], operators_embed, None)
    assert jnp.allclose(lp_fl, lp_fr, atol=2e-3), "first-layer log_probs mismatch"
    assert jnp.allclose(p_fl, p_fr, atol=2e-3), "first-layer probs mismatch"
    assert jnp.allclose(jnp.sum(p_fl), 1.0, atol=1e-4)

    print("KERNEL_OK")
</pallas_src>

<mosaic_0001>
module attributes {stable_mosaic.version = 11 : i64} {
  func.func @_selector_kernel(%arg0: i32, %arg1: memref<1x1x32xbf16, #tpu.memory_space<vmem>>, %arg2: memref<8x32xbf16, #tpu.memory_space<vmem>>, %arg3: memref<32x32xbf16, #tpu.memory_space<vmem>>, %arg4: memref<1x32xf32, #tpu.memory_space<vmem>>, %arg5: memref<32x32xbf16, #tpu.memory_space<vmem>>, %arg6: memref<1x32xf32, #tpu.memory_space<vmem>>, %arg7: memref<3x32xbf16, #tpu.memory_space<vmem>>, %arg8: memref<32x32xbf16, #tpu.memory_space<vmem>>, %arg9: memref<1x2x8xf32, #tpu.memory_space<vmem>>) attributes {dimension_semantics = [#tpu.dimension_semantics<parallel>], iteration_bounds = array<i64: 1>, scalar_prefetch = 0 : i64, scratch_operands = 0 : i64, tpu.core_type = #tpu.core_type<tc>, window_params = [{transform_indices = @transform_0, window_bounds = array<i64: 1, 1, 32>}, {pipeline_mode = #tpu.pipeline_mode<synchronous>, transform_indices = @transform_1, window_bounds = array<i64: 8, 32>}, {pipeline_mode = #tpu.pipeline_mode<synchronous>, transform_indices = @transform_2, window_bounds = array<i64: 32, 32>}, {pipeline_mode = #tpu.pipeline_mode<synchronous>, transform_indices = @transform_3, window_bounds = array<i64: 1, 32>}, {pipeline_mode = #tpu.pipeline_mode<synchronous>, transform_indices = @transform_4, window_bounds = array<i64: 32, 32>}, {pipeline_mode = #tpu.pipeline_mode<synchronous>, transform_indices = @transform_5, window_bounds = array<i64: 1, 32>}, {pipeline_mode = #tpu.pipeline_mode<synchronous>, transform_indices = @transform_6, window_bounds = array<i64: 3, 32>}, {pipeline_mode = #tpu.pipeline_mode<synchronous>, transform_indices = @transform_7, window_bounds = array<i64: 32, 32>}, {transform_indices = @transform_8, window_bounds = array<i64: 1, 2, 8>}]} {
    %c0 = arith.constant 0 : index
    %c0_0 = arith.constant 0 : index
    %c0_1 = arith.constant 0 : index
    %0 = vector.load %arg1[%c0, %c0_0, %c0_1] : memref<1x1x32xbf16, #tpu.memory_space<vmem>>, vector<1x1x32xbf16>
    %1 = vector.shape_cast %0 : vector<1x1x32xbf16> to vector<1x32xbf16>
    %c0_2 = arith.constant 0 : index
    %c0_3 = arith.constant 0 : index
    %2 = vector.load %arg3[%c0_2, %c0_3] : memref<32x32xbf16, #tpu.memory_space<vmem>>, vector<32x32xbf16>
    %cst = arith.constant dense<0.000000e+00> : vector<1x32xf32>
    %3 = tpu.matmul %1, %2, %cst {dimension_numbers = #tpu.dot_dimension_numbers<[1], [0], [0], [1], [0, 0, 1, 1], [], []>} : vector<1x32xbf16>, vector<32x32xbf16>, vector<1x32xf32> -> vector<1x32xf32>
    %c0_4 = arith.constant 0 : index
    %c0_5 = arith.constant 0 : index
    %4 = vector.load %arg4[%c0_4, %c0_5] : memref<1x32xf32, #tpu.memory_space<vmem>>, vector<1x32xf32>
    %5 = arith.addf %3, %4 : vector<1x32xf32>
    %c0_6 = arith.constant 0 : index
    %c0_7 = arith.constant 0 : index
    %6 = vector.load %arg6[%c0_6, %c0_7] : memref<1x32xf32, #tpu.memory_space<vmem>>, vector<1x32xf32>
    %c0_8 = arith.constant 0 : index
    %c0_9 = arith.constant 0 : index
    %7 = vector.load %arg7[%c0_8, %c0_9] : memref<3x32xbf16, #tpu.memory_space<vmem>>, vector<1x32xbf16>
    %c0_10 = arith.constant 0 : index
    %c0_11 = arith.constant 0 : index
    %8 = vector.load %arg8[%c0_10, %c0_11] : memref<32x32xbf16, #tpu.memory_space<vmem>>, vector<32x32xbf16>
    %cst_12 = arith.constant dense<0.000000e+00> : vector<1x32xf32>
    %9 = tpu.matmul %7, %8, %cst_12 {dimension_numbers = #tpu.dot_dimension_numbers<[1], [0], [0], [1], [0, 0, 1, 1], [], []>} : vector<1x32xbf16>, vector<32x32xbf16>, vector<1x32xf32> -> vector<1x32xf32>
    %10 = arith.addf %6, %9 : vector<1x32xf32>
    %c0_13 = arith.constant 0 : index
    %c0_14 = arith.constant 0 : index
    %11 = vector.load %arg2[%c0_13, %c0_14] : memref<8x32xbf16, #tpu.memory_space<vmem>>, vector<8x32xbf16>
    %c0_15 = arith.constant 0 : index
    %c0_16 = arith.constant 0 : index
    %12 = vector.load %arg5[%c0_15, %c0_16] : memref<32x32xbf16, #tpu.memory_space<vmem>>, vector<32x32xbf16>
    %cst_17 = arith.constant dense<0.000000e+00> : vector<8x32xf32>
    %13 = tpu.matmul %11, %12, %cst_17 {dimension_numbers = #tpu.dot_dimension_numbers<[1], [0], [0], [1], [0, 0, 1, 1], [], []>} : vector<8x32xbf16>, vector<32x32xbf16>, vector<8x32xf32> -> vector<8x32xf32>
    %14 = vector.broadcast %10 : vector<1x32xf32> to vector<8x32xf32>
    %15 = arith.addf %13, %14 : vector<8x32xf32>
    %16 = arith.mulf %15, %15 : vector<8x32xf32>
    %cst_18 = arith.constant dense<0.000000e+00> : vector<8xf32>
    %17 = vector.multi_reduction <add>, %16, %cst_18 [1] : vector<8x32xf32> to vector<8xf32>
    %18 = vector.shape_cast %17 : vector<8xf32> to vector<8x1xf32>
    %cst_19 = arith.constant 1.000000e-24 : f32
    %19 = vector.broadcast %cst_19 : f32 to vector<8x1xf32>
    %20 = arith.maximumf %18, %19 : vector<8x1xf32>
    %21 = math.rsqrt %20 : vector<8x1xf32>
    %22 = vector.broadcast %21 : vector<8x1xf32> to vector<8x32xf32>
    %23 = arith.mulf %15, %22 : vector<8x32xf32>
    %24 = arith.mulf %5, %5 : vector<1x32xf32>
    %cst_20 = arith.constant dense<0.000000e+00> : vector<1xf32>
    %25 = vector.multi_reduction <add>, %24, %cst_20 [1] : vector<1x32xf32> to vector<1xf32>
    %26 = vector.shape_cast %25 : vector<1xf32> to vector<1x1xf32>
    %cst_21 = arith.constant 1.000000e-24 : f32
    %27 = vector.broadcast %cst_21 : f32 to vector<1x1xf32>
    %28 = arith.maximumf %26, %27 : vector<1x1xf32>
    %29 = math.rsqrt %28 : vector<1x1xf32>
    %cst_22 = arith.constant dense<0.000000e+00> : vector<1x8xf32>
    %30 = tpu.matmul %5, %23, %cst_22 {dimension_numbers = #tpu.dot_dimension_numbers<[1], [1], [0], [0], [0, 0, 1, 0], [], []>} : vector<1x32xf32>, vector<8x32xf32>, vector<1x8xf32> -> vector<1x8xf32>
    %31 = vector.broadcast %29 : vector<1x1xf32> to vector<1x8xf32>
    %32 = arith.mulf %30, %31 : vector<1x8xf32>
    %cst_23 = arith.constant dense<0xFF800000> : vector<1xf32>
    %33 = vector.multi_reduction <maximumf>, %32, %cst_23 [1] : vector<1x8xf32> to vector<1xf32>
    %34 = vector.shape_cast %33 : vector<1xf32> to vector<1x1xf32>
    %35 = vector.broadcast %34 : vector<1x1xf32> to vector<1x8xf32>
    %36 = arith.subf %32, %35 : vector<1x8xf32>
    %37 = math.exp %36 : vector<1x8xf32>
    %cst_24 = arith.constant dense<0.000000e+00> : vector<1xf32>
    %38 = vector.multi_reduction <add>, %37, %cst_24 [1] : vector<1x8xf32> to vector<1xf32>
    %39 = vector.shape_cast %38 : vector<1xf32> to vector<1x1xf32>
    %40 = tpu.reciprocal %39 : vector<1x1xf32> -> vector<1x1xf32>
    %41 = vector.broadcast %40 : vector<1x1xf32> to vector<1x8xf32>
    %42 = arith.mulf %37, %41 : vector<1x8xf32>
    %43 = math.log %39 : vector<1x1xf32>
    %44 = vector.broadcast %43 : vector<1x1xf32> to vector<1x8xf32>
    %45 = arith.subf %36, %44 : vector<1x8xf32>
    %46 = tpu.concatenate %45, %42 in 0 : vector<1x8xf32>, vector<1x8xf32> -> vector<2x8xf32>
    %c0_25 = arith.constant 0 : index
    %c0_26 = arith.constant 0 : index
    %c0_27 = arith.constant 0 : index
    %47 = vector.load %arg9[%c0_25, %c0_26, %c0_27] : memref<1x2x8xf32, #tpu.memory_space<vmem>>, vector<1x2x8xf32>
    %48 = vector.shape_cast %47 : vector<1x2x8xf32> to vector<2x8xf32>
    %49 = vector.shape_cast %46 : vector<2x8xf32> to vector<1x2x8xf32>
    tpu.vector_store %arg9[%c0_25, %c0_26, %c0_27], %49 {strides = array<i32>} : memref<1x2x8xf32, #tpu.memory_space<vmem>>, vector<1x2x8xf32>,
    return
  }
  func.func @transform_0(%arg0: i32) -> (i32, i32, i32) {
    %c0_i32 = arith.constant 0 : i32
    %c0_i32_0 = arith.constant 0 : i32
    %c0_i32_1 = arith.constant 0 : i32
    return %arg0, %c0_i32, %c0_i32_0 : i32, i32, i32
  }
  func.func @transform_1(%arg0: i32) -> (i32, i32) {
    %c0_i32 = arith.constant 0 : i32
    %c0_i32_0 = arith.constant 0 : i32
    %c0_i32_1 = arith.constant 0 : i32
    return %c0_i32, %c0_i32_0 : i32, i32
  }
  func.func @transform_2(%arg0: i32) -> (i32, i32) {
    %c0_i32 = arith.constant 0 : i32
    %c0_i32_0 = arith.constant 0 : i32
    %c0_i32_1 = arith.constant 0 : i32
    return %c0_i32, %c0_i32_0 : i32, i32
  }
  func.func @transform_3(%arg0: i32) -> (i32, i32) {
    %c0_i32 = arith.constant 0 : i32
    %c0_i32_0 = arith.constant 0 : i32
    %c0_i32_1 = arith.constant 0 : i32
    return %c0_i32, %c0_i32_0 : i32, i32
  }
  func.func @transform_4(%arg0: i32) -> (i32, i32) {
    %c0_i32 = arith.constant 0 : i32
    %c0_i32_0 = arith.constant 0 : i32
    %c0_i32_1 = arith.constant 0 : i32
    return %c0_i32, %c0_i32_0 : i32, i32
  }
  func.func @transform_5(%arg0: i32) -> (i32, i32) {
    %c0_i32 = arith.constant 0 : i32
    %c0_i32_0 = arith.constant 0 : i32
    %c0_i32_1 = arith.constant 0 : i32
    return %c0_i32, %c0_i32_0 : i32, i32
  }
  func.func @transform_6(%arg0: i32) -> (i32, i32) {
    %c0_i32 = arith.constant 0 : i32
    %c0_i32_0 = arith.constant 0 : i32
    %c0_i32_1 = arith.constant 0 : i32
    return %c0_i32, %c0_i32_0 : i32, i32
  }
  func.func @transform_7(%arg0: i32) -> (i32, i32) {
    %c0_i32 = arith.constant 0 : i32
    %c0_i32_0 = arith.constant 0 : i32
    %c0_i32_1 = arith.constant 0 : i32
    return %c0_i32, %c0_i32_0 : i32, i32
  }
  func.func @transform_8(%arg0: i32) -> (i32, i32, i32) {
    %c0_i32 = arith.constant 0 : i32
    %c0_i32_0 = arith.constant 0 : i32
    %c0_i32_1 = arith.constant 0 : i32
    return %arg0, %c0_i32, %c0_i32_0 : i32, i32, i32
  }
}

</mosaic_0001>

<llo_original>
// kernel: tpu_custom_call.1
$region0: #{tpu_custom_call.1}
  #allocation0 [shape = 'u32[]', space=smem, size = 0x4, offset = 0x4, fixed_abs, tag = 'smem constant byte address 0x4 - core index']
  #allocation1 [shape = 'u32[144,128]{1,0:T(1,128)}', space=vmem, size = 0x12000, scoped, tag = 'internal scratch']
  %s0 = inlined_call_operand.hbm [shape: bf16[1,1,32], index: 0, kind: input, shape index: {}]
  %s1 = inlined_call_operand.hbm [shape: bf16[8,32], index: 1, kind: input, shape index: {}]
  %s2 = inlined_call_operand.hbm [shape: bf16[32,32], index: 2, kind: input, shape index: {}]
  %s3 = inlined_call_operand.vmem [shape: f32[1,32], index: 3, kind: input, shape index: {}]
  %s4 = inlined_call_operand.hbm [shape: bf16[32,32], index: 4, kind: input, shape index: {}]
  %s5 = inlined_call_operand.vmem [shape: f32[1,32], index: 5, kind: input, shape index: {}]
  %s6 = inlined_call_operand.vmem [shape: bf16[3,32], index: 6, kind: input, shape index: {}]
  %s7 = inlined_call_operand.vmem [shape: bf16[32,32], index: 7, kind: input, shape index: {}]
  %s8 = inlined_call_operand.hbm [shape: f32[1,2,8], index: 8, kind: output, shape index: {}]
  %s9 = sld [smem:[#allocation0]]
  $region58: #{tpu_custom_call.1} parent=0
    _
  %s11 = ssub.s32 1, %s9
  %s12 = scalar_select 0, %s11, %s9
  $region1: #{tpu_custom_call.1} parent=0
    #allocation2 [shape = 'u8[512]{0}', space=vmem, size = 0x400, scoped, tag = 'input window, operand 0, single buffered']
    #allocation3 [shape = 's32[1]{0}', space=sflag, size = 0x4, scoped, tag = 'scoped memory for tpu_custom_call.1']
    #allocation4 [shape = 's32[1]{0}', space=sflag, size = 0x4, scoped, tag = 'scoped memory for tpu_custom_call.1']
    #allocation5 [shape = 'u8[2048]{0}', space=vmem, size = 0x800, scoped, tag = 'input window, operand 1, single buffered']
    #allocation6 [shape = 's32[1]{0}', space=sflag, size = 0x4, scoped, tag = 'scoped memory for tpu_custom_call.1']
    #allocation7 [shape = 'u8[8192]{0}', space=vmem, size = 0x2000, scoped, tag = 'input window, operand 2, single buffered']
    #allocation8 [shape = 'u8[8192]{0}', space=vmem, size = 0x2000, scoped, tag = 'input window, operand 4, single buffered']
    #allocation9 [shape = 's32[1]{0}', space=sflag, size = 0x4, scoped, tag = 'scoped memory for tpu_custom_call.1']
    #allocation10 [shape = 'u8[1024]{0}', space=vmem, size = 0x400, scoped, tag = 'output window, operand 0, single buffered']
    %13 = vsyncpa [#allocation3], 0
    %14 = vsyncpa [#allocation6], 0
    %15 = vsyncpa [#allocation9], 0
    %16 = vsyncpa [#allocation4], 0
    // Predicated region
    $region2: #{tpu_custom_call.1} parent=1 // pred_check
      _
    $region3: #{tpu_custom_call.1} parent=1 // pred_check_branch
      %18 = sbr.rel (0) target = $region5
    $region4: #{tpu_custom_call.1} parent=1 // pred_region
      %s20 = ssub.s32 16, 16
      %21 = vsyncadd [#allocation3], %s20
      %s23 = sshll.u32 [#allocation2], 4
      %s24 = int_to_ptr.vmem [resolvable:$true] %s23
      %26 = dma.hbm_to_vmem [thread:$0]  %s0, 16, %s24, [#allocation3]
    $region5: #{tpu_custom_call.1} parent=1 // pred_fallthru
      _
    // Predicated region
    $region6: #{tpu_custom_call.1} parent=1 // pred_check
      _
    $region7: #{tpu_custom_call.1} parent=1 // pred_check_branch
      %28 = sbr.rel (0) target = $region9
    $region8: #{tpu_custom_call.1} parent=1 // pred_region
      %s30 = ssub.s32 64, 64
      %31 = vsyncadd [#allocation6], %s30
      %s33 = sshll.u32 [#allocation5], 4
      %s34 = int_to_ptr.vmem [resolvable:$true] %s33
      %36 = dma.hbm_to_vmem [thread:$0]  %s1, 64, %s34, [#allocation6]
    $region9: #{tpu_custom_call.1} parent=1 // pred_fallthru
      _
    // Predicated region
    $region10: #{tpu_custom_call.1} parent=1 // pred_check
      _
    $region11: #{tpu_custom_call.1} parent=1 // pred_check_branch
      %38 = sbr.rel (0) target = $region13
    $region12: #{tpu_custom_call.1} parent=1 // pred_region
      %s40 = ssub.s32 256, 256
      %41 = vsyncadd [#allocation6], %s40
      %s42 = sshll.u32 [#allocation7], 4
      %s43 = int_to_ptr.vmem [resolvable:$true] %s42
      %48 = dma.hbm_to_vmem [thread:$0]  %s2, 256, %s43, [#allocation6], 64, 64, 4
    $region13: #{tpu_custom_call.1} parent=1 // pred_fallthru
      _
    // Predicated region
    $region14: #{tpu_custom_call.1} parent=1 // pred_check
      _
    $region15: #{tpu_custom_call.1} parent=1 // pred_check_branch
      %50 = sbr.rel (0) target = $region17
    $region16: #{tpu_custom_call.1} parent=1 // pred_region
      _
    $region17: #{tpu_custom_call.1} parent=1 // pred_fallthru
      _
    // Predicated region
    $region18: #{tpu_custom_call.1} parent=1 // pred_check
      _
    $region19: #{tpu_custom_call.1} parent=1 // pred_check_branch
      %52 = sbr.rel (0) target = $region21
    $region20: #{tpu_custom_call.1} parent=1 // pred_region
      %s54 = ssub.s32 256, 256
      %55 = vsyncadd [#allocation9], %s54
      %s56 = sshll.u32 [#allocation8], 4
      %s57 = int_to_ptr.vmem [resolvable:$true] %s56
      %62 = dma.hbm_to_vmem [thread:$0]  %s4, 256, %s57, [#allocation9], 64, 64, 4
    $region21: #{tpu_custom_call.1} parent=1 // pred_fallthru
      _
    // Predicated region
    $region22: #{tpu_custom_call.1} parent=1 // pred_check
      _
    $region23: #{tpu_custom_call.1} parent=1 // pred_check_branch
      %64 = sbr.rel (0) target = $region25
    $region24: #{tpu_custom_call.1} parent=1 // pred_region
      _
    $region25: #{tpu_custom_call.1} parent=1 // pred_fallthru
      _
    // Predicated region
    $region26: #{tpu_custom_call.1} parent=1 // pred_check
      _
    $region27: #{tpu_custom_call.1} parent=1 // pred_check_branch
      %66 = sbr.rel (0) target = $region29
    $region28: #{tpu_custom_call.1} parent=1 // pred_region
      _
    $region29: #{tpu_custom_call.1} parent=1 // pred_fallthru
      _
    // Predicated region
    $region30: #{tpu_custom_call.1} parent=1 // pred_check
      _
    $region31: #{tpu_custom_call.1} parent=1 // pred_check_branch
      %68 = sbr.rel (0) target = $region33
    $region32: #{tpu_custom_call.1} parent=1 // pred_region
      _
    $region33: #{tpu_custom_call.1} parent=1 // pred_fallthru
      _
    // Predicated region
    $region34: #{tpu_custom_call.1} parent=1 // pred_check
      _
    $region35: #{tpu_custom_call.1} parent=1 // pred_check_branch
      %70 = sbr.rel (0) target = $region37
    $region36: #{tpu_custom_call.1} parent=1 // pred_region
      %71 = dma.done [#allocation3], 16
    $region37: #{tpu_custom_call.1} parent=1 // pred_fallthru
      _
    // Predicated region
    $region38: #{tpu_custom_call.1} parent=1 // pred_check
      _
    $region39: #{tpu_custom_call.1} parent=1 // pred_check_branch
      %73 = sbr.rel (0) target = $region41
    $region40: #{tpu_custom_call.1} parent=1 // pred_region
      %74 = dma.done [#allocation6], 64
    $region41: #{tpu_custom_call.1} parent=1 // pred_fallthru
      _
    // Predicated region
    $region42: #{tpu_custom_call.1} parent=1 // pred_check
      _
    $region43: #{tpu_custom_call.1} parent=1 // pred_check_branch
      %76 = sbr.rel (0) target = $region45
    $region44: #{tpu_custom_call.1} parent=1 // pred_region
      %77 = dma.done [#allocation6], 256
    $region45: #{tpu_custom_call.1} parent=1 // pred_fallthru
      _
    // Predicated region
    $region46: #{tpu_custom_call.1} parent=1 // pred_check
      _
    $region47: #{tpu_custom_call.1} parent=1 // pred_check_branch
      %79 = sbr.rel (0) target = $region49
    $region48: #{tpu_custom_call.1} parent=1 // pred_region
      %80 = dma.done [#allocation9], 256
    $region49: #{tpu_custom_call.1} parent=1 // pred_fallthru
      _
    %v82 = vld [vmem:[#allocation2] sm:$0x1]
    %v83 = vld [vmem:[#allocation7] sm:$0xf]
    %v84 = vld [vmem:[#allocation7 + $0x4] sm:$0xf]
    %v85 = vld [vmem:[#allocation7 + $0x8] sm:$0xf]
    %v86 = vld [vmem:[#allocation7 + $0xc] sm:$0xf]
    %v87 = vld [vmem:[%s3] sm:$0x1]
    %v92 = vunpack.c.l.b16 %v83
    %v93 = vunpack.c.l.b16 %v84
    %v94 = vunpack.c.l.b16 %v85
    %v95 = vunpack.c.l.b16 %v86
    %v96 = vpack.c.b16 %v93, %v92
    %v97 = vpack.c.b16 %v95, %v94
    %vm100 = vcmask 261120
    %v102 = vsel %vm100, %v82, 0
    %104 = vmatprep.subr.bf16.mxu0 0
    %105 = vmatpush1.bf16.msra.mxu0 %v96
    %106 = vmatprep.subr.bf16.mxu0 0
    %107 = vmatpush1.bf16.msra.mxu0 %v97
    %108 = vmatprep.subr.bf16.mxu0 0
    %109 = vmatpush1.bf16.msra.mxu0 0
    %110 = vmatprep.subr.bf16.mxu0 0
    %111 = vmatpush1.bf16.msra.mxu0 0
    %112 = vmatprep.subr.bf16.mxu0 0
    %113 = vmatpush1.bf16.msra.mxu0 0
    %114 = vmatprep.subr.bf16.mxu0 0
    %115 = vmatpush1.bf16.msra.mxu0 0
    %116 = vmatprep.subr.bf16.mxu0 0
    %117 = vmatpush1.bf16.msra.mxu0 0
    %118 = vmatprep.subr.bf16.mxu0 0
    %119 = vmatpush1.bf16.msra.mxu0 0
    %120 = vmatprep.subr.bf16.mxu0 0
    %121 = vmatpush1.bf16.msra.mxu0 0
    %122 = vmatprep.subr.bf16.mxu0 0
    %123 = vmatpush1.bf16.msra.mxu0 0
    %124 = vmatprep.subr.bf16.mxu0 0
    %125 = vmatpush1.bf16.msra.mxu0 0
    %126 = vmatprep.subr.bf16.mxu0 0
    %127 = vmatpush1.bf16.msra.mxu0 0
    %128 = vmatprep.subr.bf16.mxu0 0
    %129 = vmatpush1.bf16.msra.mxu0 0
    %130 = vmatprep.subr.bf16.mxu0 0
    %131 = vmatpush1.bf16.msra.mxu0 0
    %132 = vmatprep.subr.bf16.mxu0 0
    %133 = vmatpush1.bf16.msra.mxu0 0
    %134 = vmatprep.subr.bf16.mxu0 0
    %135 = vmatpush1.bf16.msra.mxu0 0
    %136 = vmatprep.mubr.bf16.mxu0 0
    %137 = vmatmul.mubr.bf16.gmra.mrb[0].mxu0 %v102
    %v138 = vpop.f32.mrb[0].mxu0
    %v139 = vadd.f32 %v87, %v138
    %v140 = vpop.f32.mrb[0].mxu0
    %v141 = vpop.f32.mrb[0].mxu0
    %v142 = vpop.f32.mrb[0].mxu0
    %143 = vdwg.mxu0
    %v144 = vld [vmem:[%s5] sm:$0x1]
    %v145 = vld [vmem:[%s6] sm:$0x1]
    %v146 = vld [vmem:[%s7] sm:$0xf]
    %v147 = vld [vmem:[%s7 + $0x4] sm:$0xf]
    %v148 = vld [vmem:[%s7 + $0x8] sm:$0xf]
    %v149 = vld [vmem:[%s7 + $0xc] sm:$0xf]
    %v154 = vunpack.c.l.b16 %v146
    %v155 = vunpack.c.l.b16 %v147
    %v156 = vunpack.c.l.b16 %v148
    %v157 = vunpack.c.l.b16 %v149
    %v158 = vpack.c.b16 %v155, %v154
    %v159 = vpack.c.b16 %v157, %v156
    %v163 = vsel %vm100, %v145, 0
    %165 = vmatprep.subr.bf16.mxu0 0
    %166 = vmatpush1.bf16.msra.mxu0 %v158
    %167 = vmatprep.subr.bf16.mxu0 0
    %168 = vmatpush1.bf16.msra.mxu0 %v159
    %169 = vmatprep.subr.bf16.mxu0 0
    %170 = vmatpush1.bf16.msra.mxu0 0
    %171 = vmatprep.subr.bf16.mxu0 0
    %172 = vmatpush1.bf16.msra.mxu0 0
    %173 = vmatprep.subr.bf16.mxu0 0
    %174 = vmatpush1.bf16.msra.mxu0 0
    %175 = vmatprep.subr.bf16.mxu0 0
    %176 = vmatpush1.bf16.msra.mxu0 0
    %177 = vmatprep.subr.bf16.mxu0 0
    %178 = vmatpush1.bf16.msra.mxu0 0
    %179 = vmatprep.subr.bf16.mxu0 0
    %180 = vmatpush1.bf16.msra.mxu0 0
    %181 = vmatprep.subr.bf16.mxu0 0
    %182 = vmatpush1.bf16.msra.mxu0 0
    %183 = vmatprep.subr.bf16.mxu0 0
    %184 = vmatpush1.bf16.msra.mxu0 0
    %185 = vmatprep.subr.bf16.mxu0 0
    %186 = vmatpush1.bf16.msra.mxu0 0
    %187 = vmatprep.subr.bf16.mxu0 0
    %188 = vmatpush1.bf16.msra.mxu0 0
    %189 = vmatprep.subr.bf16.mxu0 0
    %190 = vmatpush1.bf16.msra.mxu0 0
    %191 = vmatprep.subr.bf16.mxu0 0
    %192 = vmatpush1.bf16.msra.mxu0 0
    %193 = vmatprep.subr.bf16.mxu0 0
    %194 = vmatpush1.bf16.msra.mxu0 0
    %195 = vmatprep.subr.bf16.mxu0 0
    %196 = vmatpush1.bf16.msra.mxu0 0
    %197 = vmatprep.mubr.bf16.mxu0 0
    %198 = vmatmul.mubr.bf16.gmra.mrb[0].mxu0 %v163
    %v199 = vpop.f32.mrb[0].mxu0
    %v200 = vadd.f32 0.0, %v199
    %v201 = vpop.f32.mrb[0].mxu0
    %v202 = vpop.f32.mrb[0].mxu0
    %v203 = vpop.f32.mrb[0].mxu0
    %204 = vdwg.mxu0
    %v205 = vadd.f32 %v144, %v200
    %v206 = vld [vmem:[#allocation5] sm:$0xf]
    %v207 = vld [vmem:[#allocation8] sm:$0xf]
    %v208 = vld [vmem:[#allocation8 + $0x4] sm:$0xf]
    %v209 = vld [vmem:[#allocation8 + $0x8] sm:$0xf]
    %v210 = vld [vmem:[#allocation8 + $0xc] sm:$0xf]
    %v212 = vlaneseq
    %v213 = vshrl.u32 %v212, 7
    %v214 = vsub.s32 0, %v213
    %v215 = vrot.slane %v205, %v214
    %v221 = vunpack.c.l.b16 %v207
    %v222 = vunpack.c.l.b16 %v208
    %v223 = vunpack.c.l.b16 %v209
    %v224 = vunpack.c.l.b16 %v210
    %v225 = vpack.c.b16 %v222, %v221
    %v226 = vpack.c.b16 %v224, %v223
    %v230 = vsel %vm100, %v206, 0
    %232 = vmatprep.subr.bf16.mxu0 0
    %233 = vmatpush1.bf16.msra.mxu0 %v225
    %234 = vmatprep.subr.bf16.mxu0 0
    %235 = vmatpush1.bf16.msra.mxu0 %v226
    %236 = vmatprep.subr.bf16.mxu0 0
    %237 = vmatpush1.bf16.msra.mxu0 0
    %238 = vmatprep.subr.bf16.mxu0 0
    %239 = vmatpush1.bf16.msra.mxu0 0
    %240 = vmatprep.subr.bf16.mxu0 0
    %241 = vmatpush1.bf16.msra.mxu0 0
    %242 = vmatprep.subr.bf16.mxu0 0
    %243 = vmatpush1.bf16.msra.mxu0 0
    %244 = vmatprep.subr.bf16.mxu0 0
    %245 = vmatpush1.bf16.msra.mxu0 0
    %246 = vmatprep.subr.bf16.mxu0 0
    %247 = vmatpush1.bf16.msra.mxu0 0
    %248 = vmatprep.subr.bf16.mxu0 0
    %249 = vmatpush1.bf16.msra.mxu0 0
    %250 = vmatprep.subr.bf16.mxu0 0
    %251 = vmatpush1.bf16.msra.mxu0 0
    %252 = vmatprep.subr.bf16.mxu0 0
    %253 = vmatpush1.bf16.msra.mxu0 0
    %254 = vmatprep.subr.bf16.mxu0 0
    %255 = vmatpush1.bf16.msra.mxu0 0
    %256 = vmatprep.subr.bf16.mxu0 0
    %257 = vmatpush1.bf16.msra.mxu0 0
    %258 = vmatprep.subr.bf16.mxu0 0
    %259 = vmatpush1.bf16.msra.mxu0 0
    %260 = vmatprep.subr.bf16.mxu0 0
    %261 = vmatpush1.bf16.msra.mxu0 0
    %262 = vmatprep.subr.bf16.mxu0 0
    %263 = vmatpush1.bf16.msra.mxu0 0
    %264 = vmatprep.mubr.bf16.mxu0 0
    %265 = vmatmul.mubr.bf16.gmra.mrb[0].mxu0 %v230
    %v266 = vpop.f32.mrb[0].mxu0
    %v267 = vadd.f32 %v215, %v266
    %v268 = vpop.f32.mrb[0].mxu0
    %v269 = vpop.f32.mrb[0].mxu0
    %v270 = vpop.f32.mrb[0].mxu0
    %271 = vdwg.mxu0
    %v272 = vmul.f32 %v267, %v267
    %v273 = vsel %vm100, %v272, 0.0
    %274 = vadd.xlane.f32.xlu0 %v273
    %v275 = vpop.xlane.xlu0 %274
    %v276 = vmax.f32 %v275, 1e-24
    %v277 = vrsqrt.pop %v276
    %v278 = vmul.f32 %v267, %v277
    %v279 = vmul.f32 %v139, %v139
    %vm280 = vcmask 253952
    %v281 = vsel %vm280, %v279, 0.0
    %282 = vadd.xlane.f32.xlu0 %v281
    %v283 = vpop.xlane.xlu0 %282
    %v284 = vmax.f32 %v283, 1e-24
    %v285 = vrsqrt.pop %v284
    %v287 = vsel %vm100, %v139, 0
    %v290 = vsel %vm100, %v278, 0
    %292 = vmatprep.subr.mxu0 0.0
    %293 = vmatpush1.xpose.msra.mxu0 %v290
    %294 = vmatprep.subr.mxu0 0.0
    %295 = vmatpush1.xpose.msra.mxu0 0.0
    %296 = vmatprep.subr.mxu0 0.0
    %297 = vmatpush1.xpose.msra.mxu0 0.0
    %298 = vmatprep.subr.mxu0 0.0
    %299 = vmatpush1.xpose.msra.mxu0 0.0
    %300 = vmatprep.subr.mxu0 0.0
    %301 = vmatpush1.xpose.msra.mxu0 0.0
    %302 = vmatprep.subr.mxu0 0.0
    %303 = vmatpush1.xpose.msra.mxu0 0.0
    %304 = vmatprep.subr.mxu0 0.0
    %305 = vmatpush1.xpose.msra.mxu0 0.0
    %306 = vmatprep.subr.mxu0 0.0
    %307 = vmatpush1.xpose.msra.mxu0 0.0
    %308 = vmatprep.subr.mxu0 0.0
    %309 = vmatpush1.xpose.msra.mxu0 0.0
    %310 = vmatprep.subr.mxu0 0.0
    %311 = vmatpush1.xpose.msra.mxu0 0.0
    %312 = vmatprep.subr.mxu0 0.0
    %313 = vmatpush1.xpose.msra.mxu0 0.0
    %314 = vmatprep.subr.mxu0 0.0
    %315 = vmatpush1.xpose.msra.mxu0 0.0
    %316 = vmatprep.subr.mxu0 0.0
    %317 = vmatpush1.xpose.msra.mxu0 0.0
    %318 = vmatprep.subr.mxu0 0.0
    %319 = vmatpush1.xpose.msra.mxu0 0.0
    %320 = vmatprep.subr.mxu0 0.0
    %321 = vmatpush1.xpose.msra.mxu0 0.0
    %322 = vmatprep.subr.mxu0 0.0
    %323 = vmatpush1.xpose.msra.mxu0 0.0
    %324 = vmatprep.subr.mxu0 0.0
    %325 = vmatpush1.xpose.msra.mxu0 0.0
    %326 = vmatprep.subr.mxu0 0.0
    %327 = vmatpush1.xpose.msra.mxu0 0.0
    %328 = vmatprep.subr.mxu0 0.0
    %329 = vmatpush1.xpose.msra.mxu0 0.0
    %330 = vmatprep.subr.mxu0 0.0
    %331 = vmatpush1.xpose.msra.mxu0 0.0
    %332 = vmatprep.subr.mxu0 0.0
    %333 = vmatpush1.xpose.msra.mxu0 0.0
    %334 = vmatprep.subr.mxu0 0.0
    %335 = vmatpush1.xpose.msra.mxu0 0.0
    %336 = vmatprep.subr.mxu0 0.0
    %337 = vmatpush1.xpose.msra.mxu0 0.0
    %338 = vmatprep.subr.mxu0 0.0
    %339 = vmatpush1.xpose.msra.mxu0 0.0
    %340 = vmatprep.subr.mxu0 0.0
    %341 = vmatpush1.xpose.msra.mxu0 0.0
    %342 = vmatprep.subr.mxu0 0.0
    %343 = vmatpush1.xpose.msra.mxu0 0.0
    %344 = vmatprep.subr.mxu0 0.0
    %345 = vmatpush1.xpose.msra.mxu0 0.0
    %346 = vmatprep.subr.mxu0 0.0
    %347 = vmatpush1.xpose.msra.mxu0 0.0
    %348 = vmatprep.subr.mxu0 0.0
    %349 = vmatpush1.xpose.msra.mxu0 0.0
    %350 = vmatprep.subr.mxu0 0.0
    %351 = vmatpush1.xpose.msra.mxu0 0.0
    %352 = vmatprep.subr.mxu0 0.0
    %353 = vmatpush1.xpose.msra.mxu0 0.0
    %354 = vmatprep.subr.mxu0 0.0
    %355 = vmatpush1.xpose.msra.mxu0 0.0
    %356 = vmatprep.mubr.f32.mxu0 0.0
    %357 = vmatmul.mubr.f32.gmra.mrb[0].mxu0 %v287
    %v358 = vpop.f32.mrb[0].mxu0
    %v359 = vadd.f32 0.0, %v358
    %v360 = vpop.f32.mrb[0].mxu0
    %361 = vdwg.mxu0
    %v362 = vmul.f32 %v359, %v285
    %vm363 = vcmask 57344
    %v364 = vsel %vm363, %v362, -inf
    %365 = vmax.xlane.f32.xlu0 %v364
    %v366 = vpop.xlane.xlu0 %365
    %v367 = vsub.f32 %v362, %v366
    %v368 = vmul.f32 %v367, 1.442695
    %v369 = vpow.pop %v368
    %v370 = vsel %vm363, %v369, 0.0
    %371 = vadd.xlane.f32.xlu0 %v370
    %v372 = vpop.xlane.xlu0 %371
    %v373 = vrcp.pop %v372
    %v374 = vmul.f32 %v369, %v373
    %v375 = vlog2.pop %v372
    %v376 = vmul.f32 %v375, 0.6931472
    %v377 = vsub.f32 %v367, %v376
    %v379 = vrot.slane %v374, 7
    %vm381 = vcmask 1040384
    %v382 = vsel %vm381, %v377, %v379
    %vm383 = vcmask 58368
    %384 = vst.msk [vmem:[#allocation10] sm:$0x3] %vm383, %v382
    // Predicated region
    $region50: #{tpu_custom_call.1} parent=1 // pred_check
      _
    $region51: #{tpu_custom_call.1} parent=1 // pred_check_branch
      %386 = sbr.rel (0) target = $region53
    $region52: #{tpu_custom_call.1} parent=1 // pred_region
      %s388 = ssub.s32 32, 32
      %389 = vsyncadd [#allocation4], %s388
      %s391 = sshll.u32 [#allocation10], 4
      %s392 = int_to_ptr.vmem [resolvable:$true] %s391
      %394 = dma.vmem_to_hbm [thread:$0]  %s392, 32, %s8, [#allocation4]
    $region53: #{tpu_custom_call.1} parent=1 // pred_fallthru
      _
    // Predicated region
    $region54: #{tpu_custom_call.1} parent=1 // pred_check
      _
    $region55: #{tpu_custom_call.1} parent=1 // pred_check_branch
      %396 = sbr.rel (0) target = $region57
    $region56: #{tpu_custom_call.1} parent=1 // pred_region
      %397 = dma.done [#allocation4], 32
    $region57: #{tpu_custom_call.1} parent=1 // pred_fallthru
      _
    %398 = vsyncpa [#allocation3], 1
    %399 = vsyncpa [#allocation6], 1
    %400 = vsyncpa [#allocation9], 1
    %401 = vsyncpa [#allocation4], 1

</llo_original>
